<compile_context>
chip_gen: v7x
topology: tpu7x:2x2x1
jax: 0.10.0
libtpu: 0.0.40
codegen_flags: <defaults>
</compile_context>

<pallas_src>
import functools
import types

import jax
import jax.numpy as jnp
from jax.experimental import pallas as pl
from jax.experimental.pallas import tpu as pltpu


def _ceil_to(x, m):
    return ((x + m - 1) // m) * m


# ----------------------------------------------------------------------------
# Generation-gated defaults (tile sizes / scoped VMEM limit).
# ----------------------------------------------------------------------------
def _device_kind():
    try:
        return jax.devices()[0].device_kind.lower()
    except Exception:
        return ""


_KIND = _device_kind()
if ("v5" in _KIND) or ("v6" in _KIND):
    # 128 MiB physical VMEM: deeper K tiles + higher scoped limit.
    # TODO(synk): on v5e, pipeline_mode=pl.Buffered(3) on the x/w specs would
    # further hide exposed DMA; omitted here to stay portable across versions.
    _DEF_TM, _DEF_TN, _DEF_TK = 256, 256, 1024
    _VMEM_LIMIT = 64 * 1024 * 1024
else:
    # v7x (64 MiB VMEM per TC) or unknown chip: conservative, v7x-safe config.
    _DEF_TM, _DEF_TN, _DEF_TK = 256, 256, 512
    _VMEM_LIMIT = 32 * 1024 * 1024


# ----------------------------------------------------------------------------
# Pallas kernel 1: tiled GEMM + bias (+ optional ReLU), accumulate in o_ref.
# ----------------------------------------------------------------------------
def _gemm_bias_act_kernel(x_ref, w_ref, b_ref, o_ref, *, apply_relu):
    k = pl.program_id(2)

    @pl.when(k == 0)
    def _init():
        # Bias folded into the init of the VMEM-resident f32 output block:
        # no scratch accumulator and no finalize copy.
        o_ref[...] = jnp.broadcast_to(b_ref[...], o_ref.shape)

    # bf16 operands on the MXU (casts happen once at the call boundary),
    # f32 accumulation directly into the output block.
    o_ref[...] += jnp.dot(x_ref[...], w_ref[...],
                          preferred_element_type=jnp.float32)

    if apply_relu:
        @pl.when(k == pl.num_programs(2) - 1)
        def _final():
            o_ref[...] = jnp.maximum(o_ref[...], 0.0)


def gemm_bias_act(x, w, b, *, apply_relu,
                  tm=_DEF_TM, tn=_DEF_TN, tk=_DEF_TK):
    """relu?(x @ w + b) as a tiled Pallas TPU GEMM.

    x: (M, K) f32/bf16, w: (K, N) bf16/f32, b: (1, N) f32.  Returns f32 (M, N).
    """
    M, K = x.shape
    Kw, N = w.shape
    assert Kw == K and b.shape == (1, N)

    # Cast operands to bf16 once at the boundary (the f32 x tile is the
    # dominant DMA stream; halving it beats any in-kernel per-step convert).
    x = x.astype(jnp.bfloat16)
    w = w.astype(jnp.bfloat16)

    # --- tile selection -----------------------------------------------------
    M8 = _ceil_to(M, 8)                       # unmasked sublane stores
    TM = M8 if M8 <= tm else tm
    TK = K if K <= tk else tk
    N_lane = _ceil_to(N, 128)                 # lane-dense output
    if N_lane <= tn:
        TN = N_lane
    else:                                     # divisor-matched: no dead columns
        TN = max(c for c in (128, 256, 512) if c <= tn and N_lane % c == 0)

    M_pad = _ceil_to(M8, TM)
    K_pad = _ceil_to(K, TK)
    N_pad = N_lane                            # TN divides N_lane by construction

    if (M_pad, K_pad) != (M, K):
        x = jnp.pad(x, ((0, M_pad - M), (0, K_pad - K)))
    if (K_pad, N_pad) != (K, N):
        w = jnp.pad(w, ((0, K_pad - K), (0, N_pad - N)))
        b = jnp.pad(b, ((0, 0), (0, N_pad - N)))

    grid = (M_pad // TM, N_pad // TN, K_pad // TK)

    out = pl.pallas_call(
        functools.partial(_gemm_bias_act_kernel, apply_relu=apply_relu),
        out_shape=jax.ShapeDtypeStruct((M_pad, N_pad), jnp.float32),
        grid_spec=pltpu.PrefetchScalarGridSpec(
            num_scalar_prefetch=0,
            grid=grid,
            in_specs=[
                pl.BlockSpec((TM, TK), lambda i, j, k: (i, k)),
                pl.BlockSpec((TK, TN), lambda i, j, k: (k, j)),
                pl.BlockSpec((1, TN), lambda i, j, k: (0, j)),
            ],
            out_specs=pl.BlockSpec((TM, TN), lambda i, j, k: (i, j)),
        ),
        compiler_params=pltpu.CompilerParams(
            dimension_semantics=("parallel", "parallel", "arbitrary"),
            vmem_limit_bytes=_VMEM_LIMIT,
        ),
    )(x, w, b)

    if (M_pad, N_pad) != (M, N):
        out = out[:M, :N]
    return out


# ----------------------------------------------------------------------------
# Pallas kernel 2: fused GCN branch  relu(A_norm @ (X @ W) + b)
# (single pallas_call, intermediate H kept in a VMEM scratch).
# ----------------------------------------------------------------------------
def _fused_gcn_kernel(a_ref, x_ref, w_ref, b_ref, o_ref, h_ref):
    # H = X @ W  (bf16 MXU operands, f32 accumulate) -> VMEM scratch;
    # no HBM writeback / reload between the projection and the aggregation.
    h_ref[...] = jnp.dot(x_ref[...], w_ref[...],
                         preferred_element_type=jnp.float32)
    # A_norm stays f32 (value-sensitive degree normalization).
    agg = jnp.dot(a_ref[...], h_ref[...], preferred_element_type=jnp.float32)
    o_ref[...] = jnp.maximum(agg + b_ref[...], 0.0)


def fused_gcn(a_norm, x, w, b):
    """relu(a_norm @ (x @ w) + b) in one pallas_call (everything VMEM-resident)."""
    N = a_norm.shape[0]
    K = x.shape[1]
    Cp = w.shape[1]                 # already padded to a multiple of 128
    assert b.shape == (1, Cp) and w.shape[0] == K and a_norm.shape == (N, N)

    Np = _ceil_to(N, 8)             # unmasked sublane stores
    a_norm = jnp.pad(a_norm.astype(jnp.float32), ((0, Np - N), (0, Np - N)))
    x = jnp.pad(x.astype(jnp.bfloat16), ((0, Np - N), (0, 0)))
    w = w.astype(jnp.bfloat16)

    out = pl.pallas_call(
        _fused_gcn_kernel,
        out_shape=jax.ShapeDtypeStruct((Np, Cp), jnp.float32),
        grid_spec=pltpu.PrefetchScalarGridSpec(
            num_scalar_prefetch=0,
            grid=(1,),
            in_specs=[
                pl.BlockSpec((Np, Np), lambda i: (0, 0)),
                pl.BlockSpec((Np, K), lambda i: (0, 0)),
                pl.BlockSpec((K, Cp), lambda i: (0, 0)),
                pl.BlockSpec((1, Cp), lambda i: (0, 0)),
            ],
            out_specs=pl.BlockSpec((Np, Cp), lambda i: (0, 0)),
            scratch_shapes=[pltpu.VMEM((Np, Cp), jnp.float32)],
        ),
        compiler_params=pltpu.CompilerParams(
            dimension_semantics=("arbitrary",),
            vmem_limit_bytes=_VMEM_LIMIT,
        ),
    )(a_norm, x, w, b)
    return out[:N]


def _fused_fits(n_nodes, in_features, n_pad):
    """Conservative VMEM footprint check for the fused GCN kernel."""
    np_ = _ceil_to(n_nodes, 8)
    bytes_ = (4 * np_ * np_          # a_norm f32
              + 2 * np_ * in_features  # x bf16
              + 2 * in_features * n_pad  # w bf16
              + 4 * n_pad            # bias f32
              + 4 * np_ * n_pad      # output f32
              + 4 * np_ * n_pad)     # H scratch f32
    return bytes_ <= 12 * 1024 * 1024   # leave headroom for double-buffering


# ----------------------------------------------------------------------------
# GCN glue: dense symmetric-normalized adjacency  Â = D^-1/2 (A + I) D^-1/2.
# ----------------------------------------------------------------------------
def _gcn_normalized_adjacency(edge_index, num_nodes):
    # TODO(synk): the edge_index scatter / degree normalization is a sparse,
    # data-dependent gather with no clean Pallas equivalent at this scale; it
    # stays in plain JAX and the aggregation runs as a dense MXU matmul.
    src = edge_index[0]
    dst = edge_index[1]
    a = jnp.zeros((num_nodes, num_nodes), jnp.float32).at[dst, src].set(1.0)
    a = jnp.maximum(a, jnp.eye(num_nodes, dtype=jnp.float32))  # self loops
    deg = a.sum(axis=1)
    d_inv_sqrt = jax.lax.rsqrt(jnp.maximum(deg, 1.0))
    return (d_inv_sqrt[:, None] * a) * d_inv_sqrt[None, :]


# ----------------------------------------------------------------------------
# Module mirror
# ----------------------------------------------------------------------------
class GraphValue:
    """Minimal stand-in for the torch_geometric `value` container."""

    def __init__(self, x, edge_index):
        self.x = x
        self.data = types.SimpleNamespace(edge_index=edge_index)


class Tox21GCNorLinearPallas:
    """Mirror of Tox21GCNorLinear with deterministic in-script params.

    The 'lazy' layers infer in_features at first call in PyTorch; here we take
    in_features at construction (known from the example input).
    """

    def __init__(self, out_channels, batch_size, in_features, key):
        self.out_channels = out_channels
        self.batch_size = batch_size
        self.in_features = in_features
        n_pad = _ceil_to(out_channels, 128)   # lane-dense static pad
        self._n_pad = n_pad
        k1, k2, k3 = jax.random.split(key, 3)

        # exnn.Linear(out_channels): nn.Linear default U(+-1/sqrt(fan_in)).
        bound = 1.0 / (in_features ** 0.5)
        w_lin = jax.random.uniform(
            k1, (in_features, out_channels), jnp.float32, -bound, bound)
        b_lin = jax.random.uniform(
            k2, (out_channels,), jnp.float32, -bound, bound)
        # Stored transposed (F, N), padded once to lane-dense N, cast to bf16.
        self.w_lin = jnp.pad(
            w_lin, ((0, 0), (0, n_pad - out_channels))).astype(jnp.bfloat16)
        self.b_lin = jnp.pad(
            b_lin, (0, n_pad - out_channels)).reshape(1, n_pad)

        # LazyGCNConv(out_channels): Glorot weight, zero bias (PyG defaults).
        glorot = (6.0 / (in_features + out_channels)) ** 0.5
        w_gcn = jax.random.uniform(
            k3, (in_features, out_channels), jnp.float32, -glorot, glorot)
        self.w_gcn = jnp.pad(
            w_gcn, ((0, 0), (0, n_pad - out_channels))).astype(jnp.bfloat16)
        self.b_gcn = jnp.zeros((1, n_pad), jnp.float32)
        self._zero_bias = jnp.zeros((1, n_pad), jnp.float32)

    def __call__(self, value):
        x = value.x
        n_nodes = x.shape[0]
        if n_nodes != self.batch_size:
            # GCN branch: relu(A_norm @ (X @ W_gcn) + b_gcn)
            a_norm = _gcn_normalized_adjacency(value.data.edge_index, n_nodes)
            if _fused_fits(n_nodes, x.shape[1], self._n_pad):
                out = fused_gcn(a_norm, x, self.w_gcn, self.b_gcn)
            else:
                # Large-graph fallback: two tiled GEMMs through the same
                # Pallas kernel (H round-trips HBM once).
                h = gemm_bias_act(x, self.w_gcn, self._zero_bias,
                                  apply_relu=False)
                out = gemm_bias_act(a_norm, h, self.b_gcn, apply_relu=True)
        else:
            # Linear branch: relu(X @ W_lin + b_lin)
            out = gemm_bias_act(x, self.w_lin, self.b_lin, apply_relu=True)
        value.x = out[:, : self.out_channels]   # drop static lane padding
        return value


if __name__ == "__main__":
    key = jax.random.PRNGKey(0)
    k_x_lin, k_x_gcn, k_edges, k_params = jax.random.split(key, 4)

    in_features = 64
    out_channels = 32
    batch_size = 2

    module = Tox21GCNorLinearPallas(out_channels, batch_size, in_features,
                                    k_params)

    # ---- Branch 1: node count == batch_size -> Linear + ReLU --------------
    x_lin = jax.random.normal(k_x_lin, (batch_size, in_features), jnp.float32)
    dummy_edges = jnp.zeros((2, 1), jnp.int32)
    v1 = module(GraphValue(x_lin, dummy_edges))
    out_lin = jax.block_until_ready(v1.x)

    # ---- Branch 2: node count != batch_size -> GCN + ReLU -----------------
    n_nodes, n_edges = 8, 16
    x_gcn = jax.random.normal(k_x_gcn, (n_nodes, in_features), jnp.float32)
    edge_index = jax.random.randint(k_edges, (2, n_edges), 0, n_nodes,
                                    jnp.int32)
    v2 = module(GraphValue(x_gcn, edge_index))
    out_gcn = jax.block_until_ready(v2.x)

    # ---- Plain-JAX references (f32 math on the stored bf16 weights) -------
    w_lin_f32 = module.w_lin[:, :out_channels].astype(jnp.float32)
    b_lin_f32 = module.b_lin[0, :out_channels]
    ref_lin = jnp.maximum(x_lin @ w_lin_f32 + b_lin_f32, 0.0)

    a_norm = _gcn_normalized_adjacency(edge_index, n_nodes)
    w_gcn_f32 = module.w_gcn[:, :out_channels].astype(jnp.float32)
    ref_gcn = jnp.maximum(a_norm @ (x_gcn @ w_gcn_f32), 0.0)

    assert out_lin.shape == (batch_size, out_channels)
    assert out_gcn.shape == (n_nodes, out_channels)
    # bf16 MXU operands with f32 accumulation -> loosened tolerance.
    assert jnp.allclose(out_lin, ref_lin, atol=5e-2, rtol=5e-2)
    assert jnp.allclose(out_gcn, ref_gcn, atol=5e-2, rtol=5e-2)

    print("KERNEL_OK")
</pallas_src>

<mosaic_0001>
module attributes {stable_mosaic.version = 11 : i64} {
  func.func @_gemm_bias_act_kernel(%arg0: i32, %arg1: i32, %arg2: i32, %arg3: memref<8x64xbf16, #tpu.memory_space<vmem>>, %arg4: memref<64x128xbf16, #tpu.memory_space<vmem>>, %arg5: memref<1x128xf32, #tpu.memory_space<vmem>>, %arg6: memref<8x128xf32, #tpu.memory_space<vmem>>) attributes {dimension_semantics = [#tpu.dimension_semantics<parallel>, #tpu.dimension_semantics<parallel>, #tpu.dimension_semantics<arbitrary>], iteration_bounds = array<i64: 1, 1, 1>, scalar_prefetch = 0 : i64, scratch_operands = 0 : i64, tpu.core_type = #tpu.core_type<tc>, window_params = [{transform_indices = @transform_0, window_bounds = array<i64: 8, 64>}, {transform_indices = @transform_1, window_bounds = array<i64: 64, 128>}, {transform_indices = @transform_2, window_bounds = array<i64: 1, 128>}, {transform_indices = @transform_3, window_bounds = array<i64: 8, 128>}]} {
    %c0_i32 = arith.constant 0 : i32
    %0 = arith.cmpi eq, %arg2, %c0_i32 : i32
    %1 = arith.extui %0 : i1 to i32
    %c0_i32_0 = arith.constant 0 : i32
    %2 = arith.cmpi ne, %1, %c0_i32_0 : i32
    scf.if %2 {
      %c0_10 = arith.constant 0 : index
      %c0_11 = arith.constant 0 : index
      %12 = vector.load %arg5[%c0_10, %c0_11] : memref<1x128xf32, #tpu.memory_space<vmem>>, vector<1x128xf32>
      %13 = vector.shape_cast %12 : vector<1x128xf32> to vector<1x128xf32>
      %14 = vector.broadcast %13 : vector<1x128xf32> to vector<8x128xf32>
      %c0_12 = arith.constant 0 : index
      %c0_13 = arith.constant 0 : index
      %15 = vector.load %arg6[%c0_12, %c0_13] : memref<8x128xf32, #tpu.memory_space<vmem>>, vector<8x128xf32>
      tpu.vector_store %arg6[%c0_12, %c0_13], %14 {strides = array<i32>} : memref<8x128xf32, #tpu.memory_space<vmem>>, vector<8x128xf32>,
    } else {
    }
    %c0 = arith.constant 0 : index
    %c0_1 = arith.constant 0 : index
    %3 = vector.load %arg6[%c0, %c0_1] : memref<8x128xf32, #tpu.memory_space<vmem>>, vector<8x128xf32>
    %c0_2 = arith.constant 0 : index
    %c0_3 = arith.constant 0 : index
    %4 = vector.load %arg3[%c0_2, %c0_3] : memref<8x64xbf16, #tpu.memory_space<vmem>>, vector<8x64xbf16>
    %c0_4 = arith.constant 0 : index
    %c0_5 = arith.constant 0 : index
    %5 = vector.load %arg4[%c0_4, %c0_5] : memref<64x128xbf16, #tpu.memory_space<vmem>>, vector<64x128xbf16>
    %cst = arith.constant dense<0.000000e+00> : vector<8x128xf32>
    %6 = tpu.matmul %4, %5, %cst {dimension_numbers = #tpu.dot_dimension_numbers<[1], [0], [0], [1], [0, 0, 1, 1], [], []>} : vector<8x64xbf16>, vector<64x128xbf16>, vector<8x128xf32> -> vector<8x128xf32>
    %7 = arith.addf %3, %6 : vector<8x128xf32>
    %c0_6 = arith.constant 0 : index
    %c0_7 = arith.constant 0 : index
    %8 = vector.load %arg6[%c0_6, %c0_7] : memref<8x128xf32, #tpu.memory_space<vmem>>, vector<8x128xf32>
    tpu.vector_store %arg6[%c0_6, %c0_7], %7 {strides = array<i32>} : memref<8x128xf32, #tpu.memory_space<vmem>>, vector<8x128xf32>,
    %c0_i32_8 = arith.constant 0 : i32
    %9 = arith.cmpi eq, %arg2, %c0_i32_8 : i32
    %10 = arith.extui %9 : i1 to i32
    %c0_i32_9 = arith.constant 0 : i32
    %11 = arith.cmpi ne, %10, %c0_i32_9 : i32
    scf.if %11 {
      %c0_10 = arith.constant 0 : index
      %c0_11 = arith.constant 0 : index
      %12 = vector.load %arg6[%c0_10, %c0_11] : memref<8x128xf32, #tpu.memory_space<vmem>>, vector<8x128xf32>
      %cst_12 = arith.constant 0.000000e+00 : f32
      %13 = vector.broadcast %cst_12 : f32 to vector<8x128xf32>
      %14 = arith.maximumf %12, %13 : vector<8x128xf32>
      %c0_13 = arith.constant 0 : index
      %c0_14 = arith.constant 0 : index
      %15 = vector.load %arg6[%c0_13, %c0_14] : memref<8x128xf32, #tpu.memory_space<vmem>>, vector<8x128xf32>
      tpu.vector_store %arg6[%c0_13, %c0_14], %14 {strides = array<i32>} : memref<8x128xf32, #tpu.memory_space<vmem>>, vector<8x128xf32>,
    } else {
    }
    return
  }
  func.func @transform_0(%arg0: i32, %arg1: i32, %arg2: i32) -> (i32, i32) {
    %c0_i32 = arith.constant 0 : i32
    return %arg0, %arg2 : i32, i32
  }
  func.func @transform_1(%arg0: i32, %arg1: i32, %arg2: i32) -> (i32, i32) {
    %c0_i32 = arith.constant 0 : i32
    return %arg2, %arg1 : i32, i32
  }
  func.func @transform_2(%arg0: i32, %arg1: i32, %arg2: i32) -> (i32, i32) {
    %c0_i32 = arith.constant 0 : i32
    %c0_i32_0 = arith.constant 0 : i32
    return %c0_i32, %arg1 : i32, i32
  }
  func.func @transform_3(%arg0: i32, %arg1: i32, %arg2: i32) -> (i32, i32) {
    %c0_i32 = arith.constant 0 : i32
    return %arg0, %arg1 : i32, i32
  }
}

</mosaic_0001>

<llo_original>
// kernel: tpu_custom_call.1
$region0: #{tpu_custom_call.1}
  #allocation0 [shape = 'u32[]', space=smem, size = 0x4, offset = 0x4, fixed_abs, tag = 'smem constant byte address 0x4 - core index']
  #allocation1 [shape = 'u32[144,128]{1,0:T(1,128)}', space=vmem, size = 0x12000, scoped, tag = 'internal scratch']
  %s0 = inlined_call_operand.hbm [shape: bf16[8,64], index: 0, kind: input, shape index: {}]
  %s1 = inlined_call_operand.hbm [shape: bf16[64,128], index: 1, kind: input, shape index: {}]
  %s2 = inlined_call_operand.vmem [shape: f32[1,128], index: 2, kind: input, shape index: {}]
  %s3 = inlined_call_operand.hbm [shape: f32[8,128], index: 3, kind: output, shape index: {}]
  %s4 = sld [smem:[#allocation0]]
  $region38: #{tpu_custom_call.1} parent=0
    _
  %s6 = ssub.s32 1, %s4
  %s7 = scalar_select 0, %s6, %s4
  $region1: #{tpu_custom_call.1} parent=0
    #allocation2 [shape = 'u8[2048]{0}', space=vmem, size = 0x800, scoped, tag = 'input window, operand 0, single buffered']
    #allocation3 [shape = 's32[1]{0}', space=sflag, size = 0x4, scoped, tag = 'scoped memory for tpu_custom_call.1']
    #allocation4 [shape = 's32[1]{0}', space=sflag, size = 0x4, scoped, tag = 'scoped memory for tpu_custom_call.1']
    #allocation5 [shape = 'u8[16384]{0}', space=vmem, size = 0x4000, scoped, tag = 'input window, operand 1, single buffered']
    #allocation6 [shape = 's32[1]{0}', space=sflag, size = 0x4, scoped, tag = 'scoped memory for tpu_custom_call.1']
    #allocation7 [shape = 'u8[4096]{0}', space=vmem, size = 0x1000, scoped, tag = 'output window, operand 0, single buffered']
    %8 = vsyncpa [#allocation3], 0
    %9 = vsyncpa [#allocation6], 0
    %10 = vsyncpa [#allocation4], 0
    // Predicated region
    $region2: #{tpu_custom_call.1} parent=1 // pred_check
      _
    $region3: #{tpu_custom_call.1} parent=1 // pred_check_branch
      %12 = sbr.rel (0) target = $region5
    $region4: #{tpu_custom_call.1} parent=1 // pred_region
      %s14 = ssub.s32 64, 64
      %15 = vsyncadd [#allocation3], %s14
      %s17 = sshll.u32 [#allocation2], 4
      %s18 = int_to_ptr.vmem [resolvable:$true] %s17
      %20 = dma.hbm_to_vmem [thread:$0]  %s0, 64, %s18, [#allocation3]
    $region5: #{tpu_custom_call.1} parent=1 // pred_fallthru
      _
    // Predicated region
    $region6: #{tpu_custom_call.1} parent=1 // pred_check
      _
    $region7: #{tpu_custom_call.1} parent=1 // pred_check_branch
      %22 = sbr.rel (0) target = $region9
    $region8: #{tpu_custom_call.1} parent=1 // pred_region
      %s24 = ssub.s32 512, 512
      %25 = vsyncadd [#allocation6], %s24
      %s26 = sshll.u32 [#allocation5], 4
      %s27 = int_to_ptr.vmem [resolvable:$true] %s26
      %32 = dma.hbm_to_vmem [thread:$0]  %s1, 512, %s27, [#allocation6], 64, 64, 4
    $region9: #{tpu_custom_call.1} parent=1 // pred_fallthru
      _
    // Predicated region
    $region10: #{tpu_custom_call.1} parent=1 // pred_check
      _
    $region11: #{tpu_custom_call.1} parent=1 // pred_check_branch
      %34 = sbr.rel (0) target = $region13
    $region12: #{tpu_custom_call.1} parent=1 // pred_region
      _
    $region13: #{tpu_custom_call.1} parent=1 // pred_fallthru
      _
    // Predicated region
    $region14: #{tpu_custom_call.1} parent=1 // pred_check
      _
    $region15: #{tpu_custom_call.1} parent=1 // pred_check_branch
      %36 = sbr.rel (0) target = $region17
    $region16: #{tpu_custom_call.1} parent=1 // pred_region
      %37 = dma.done [#allocation3], 64
    $region17: #{tpu_custom_call.1} parent=1 // pred_fallthru
      _
    // Predicated region
    $region18: #{tpu_custom_call.1} parent=1 // pred_check
      _
    $region19: #{tpu_custom_call.1} parent=1 // pred_check_branch
      %39 = sbr.rel (0) target = $region21
    $region20: #{tpu_custom_call.1} parent=1 // pred_region
      %40 = dma.done [#allocation6], 512
    $region21: #{tpu_custom_call.1} parent=1 // pred_fallthru
      _
    %p42 = scmp.eq.s32.totalorder 0, 0
    // Predicated region
    $region22: #{tpu_custom_call.1} parent=1 // pred_check
      %p43 = pneg %p42
    $region23: #{tpu_custom_call.1} parent=1 // pred_check_branch
      %45 = sbr.rel (%p43) target = $region25
    $region24: #{tpu_custom_call.1} parent=1 // pred_region
      %v46 = vld [vmem:[%s2] sm:$0x1]
      %v48 = vlaneseq
      %v49 = vshrl.u32 %v48, 7
      %v50 = vsub.s32 0, %v49
      %v51 = vrot.slane %v46, %v50
      %53 = vst [vmem:[#allocation7] sm:$0xff] %v51
    $region25: #{tpu_custom_call.1} parent=1 // pred_fallthru
      _
    %v54 = vld [vmem:[#allocation7] sm:$0xff]
    %v55 = vld [vmem:[#allocation2] sm:$0xf]
    %v56 = vld [vmem:[#allocation5] sm:$0xf]
    %v57 = vld [vmem:[#allocation5 + $0x4] sm:$0xf]
    %v58 = vld [vmem:[#allocation5 + $0x8] sm:$0xf]
    %v59 = vld [vmem:[#allocation5 + $0xc] sm:$0xf]
    %v60 = vld [vmem:[#allocation5 + $0x10] sm:$0xf]
    %v61 = vld [vmem:[#allocation5 + $0x14] sm:$0xf]
    %v62 = vld [vmem:[#allocation5 + $0x18] sm:$0xf]
    %v63 = vld [vmem:[#allocation5 + $0x1c] sm:$0xf]
    %v72 = vunpack.c.l.b16 %v56
    %v73 = vunpack.c.l.b16 %v57
    %v74 = vunpack.c.l.b16 %v58
    %v75 = vunpack.c.l.b16 %v59
    %v76 = vunpack.c.l.b16 %v60
    %v77 = vunpack.c.l.b16 %v61
    %v78 = vunpack.c.l.b16 %v62
    %v79 = vunpack.c.l.b16 %v63
    %v80 = vpack.c.b16 %v73, %v72
    %v81 = vpack.c.b16 %v75, %v74
    %v82 = vpack.c.b16 %v77, %v76
    %v83 = vpack.c.b16 %v79, %v78
    %vm88 = vcmask 523264
    %v90 = vsel %vm88, %v55, 0
    %92 = vmatprep.subr.bf16.mxu0 0
    %93 = vmatpush1.bf16.msra.mxu0 %v80
    %94 = vmatprep.subr.bf16.mxu0 0
    %95 = vmatpush1.bf16.msra.mxu0 %v81
    %96 = vmatprep.subr.bf16.mxu0 0
    %97 = vmatpush1.bf16.msra.mxu0 %v82
    %98 = vmatprep.subr.bf16.mxu0 0
    %99 = vmatpush1.bf16.msra.mxu0 %v83
    %100 = vmatprep.subr.bf16.mxu0 0
    %101 = vmatpush1.bf16.msra.mxu0 0
    %102 = vmatprep.subr.bf16.mxu0 0
    %103 = vmatpush1.bf16.msra.mxu0 0
    %104 = vmatprep.subr.bf16.mxu0 0
    %105 = vmatpush1.bf16.msra.mxu0 0
    %106 = vmatprep.subr.bf16.mxu0 0
    %107 = vmatpush1.bf16.msra.mxu0 0
    %108 = vmatprep.subr.bf16.mxu0 0
    %109 = vmatpush1.bf16.msra.mxu0 0
    %110 = vmatprep.subr.bf16.mxu0 0
    %111 = vmatpush1.bf16.msra.mxu0 0
    %112 = vmatprep.subr.bf16.mxu0 0
    %113 = vmatpush1.bf16.msra.mxu0 0
    %114 = vmatprep.subr.bf16.mxu0 0
    %115 = vmatpush1.bf16.msra.mxu0 0
    %116 = vmatprep.subr.bf16.mxu0 0
    %117 = vmatpush1.bf16.msra.mxu0 0
    %118 = vmatprep.subr.bf16.mxu0 0
    %119 = vmatpush1.bf16.msra.mxu0 0
    %120 = vmatprep.subr.bf16.mxu0 0
    %121 = vmatpush1.bf16.msra.mxu0 0
    %122 = vmatprep.subr.bf16.mxu0 0
    %123 = vmatpush1.bf16.msra.mxu0 0
    %124 = vmatprep.mubr.bf16.mxu0 0
    %125 = vmatmul.mubr.bf16.gmra.mrb[0].mxu0 %v90
    %v126 = vpop.f32.mrb[0].mxu0
    %v127 = vadd.f32 0.0, %v126
    %v128 = vpop.f32.mrb[0].mxu0
    %v129 = vpop.f32.mrb[0].mxu0
    %v130 = vpop.f32.mrb[0].mxu0
    %131 = vdwg.mxu0
    %v132 = vadd.f32 %v54, %v127
    %133 = vst [vmem:[#allocation7] sm:$0xff] %v132
    // Predicated region
    $region26: #{tpu_custom_call.1} parent=1 // pred_check
      %p134 = pneg %p42
    $region27: #{tpu_custom_call.1} parent=1 // pred_check_branch
      %136 = sbr.rel (%p134) target = $region29
    $region28: #{tpu_custom_call.1} parent=1 // pred_region
      %v137 = vld [vmem:[#allocation7] sm:$0xff]
      %v138 = vmax.f32 %v137, 0.0
      %139 = vst [vmem:[#allocation7] sm:$0xff] %v138
    $region29: #{tpu_custom_call.1} parent=1 // pred_fallthru
      _
    // Predicated region
    $region30: #{tpu_custom_call.1} parent=1 // pred_check
      _
    $region31: #{tpu_custom_call.1} parent=1 // pred_check_branch
      %141 = sbr.rel (0) target = $region33
    $region32: #{tpu_custom_call.1} parent=1 // pred_region
      %s143 = ssub.s32 128, 128
      %144 = vsyncadd [#allocation4], %s143
      %s146 = sshll.u32 [#allocation7], 4
      %s147 = int_to_ptr.vmem [resolvable:$true] %s146
      %149 = dma.vmem_to_hbm [thread:$0]  %s147, 128, %s3, [#allocation4]
    $region33: #{tpu_custom_call.1} parent=1 // pred_fallthru
      _
    // Predicated region
    $region34: #{tpu_custom_call.1} parent=1 // pred_check
      _
    $region35: #{tpu_custom_call.1} parent=1 // pred_check_branch
      %151 = sbr.rel (0) target = $region37
    $region36: #{tpu_custom_call.1} parent=1 // pred_region
      %152 = dma.done [#allocation4], 128
    $region37: #{tpu_custom_call.1} parent=1 // pred_fallthru
      _
    %153 = vsyncpa [#allocation3], 1
    %154 = vsyncpa [#allocation6], 1
    %155 = vsyncpa [#allocation4], 1

</llo_original>
